<compile_context>
chip_gen: v5e
topology: v5e:2x2
jax: 0.10.0
libtpu: 0.0.40
codegen_flags: <defaults>
</compile_context>

<pallas_src>
import functools
import math

import jax
import jax.numpy as jnp
from jax.experimental import pallas as pl
from jax.experimental.pallas import tpu as pltpu


def _attention_kernel(q_ref, v_ref, o_ref, m_sc, l_sc, acc_sc, *,
                      scale, seq_len, block_t, mask_t):
    # q_ref:  [B, D]       dense query tile (scale folded in below)
    # v_ref:  [B, Tb, E]   values tile for this (batch, seq) grid step
    # o_ref:  [B, E]       dense output tile (written on the last seq step)
    # m_sc/l_sc: [B, 1]    running max / running softmax denominator
    # acc_sc:   [B, E]     running weighted sum
    j = pl.program_id(1)

    @pl.when(j == 0)
    def _init():
        m_sc[...] = jnp.full_like(m_sc, -jnp.inf)
        l_sc[...] = jnp.zeros_like(l_sc)
        acc_sc[...] = jnp.zeros_like(acc_sc)

    q = q_ref[...].astype(jnp.float32) * scale          # [B, D]
    v = v_ref[...].astype(jnp.float32)                  # [B, Tb, E]

    # _get_weights: scaled dot-product scores on a lane-dense [B, Tb] view.
    s = jnp.sum(v * q[:, None, :], axis=-1)             # [B, Tb]

    if mask_t:
        t_pos = j * block_t + jax.lax.broadcasted_iota(jnp.int32, s.shape, 1)
        s = jnp.where(t_pos < seq_len, s, -jnp.inf)

    # Online softmax over the sequence axis (dim=0 of the torch weight vector).
    m_prev = m_sc[...]                                               # [B, 1]
    m_new = jnp.maximum(m_prev, jnp.max(s, axis=-1, keepdims=True))  # [B, 1]
    alpha = jnp.exp(m_prev - m_new)                                  # [B, 1]
    p = jnp.exp(s - m_new)                                           # [B, Tb]

    l_sc[...] = alpha * l_sc[...] + jnp.sum(p, axis=-1, keepdims=True)
    acc_sc[...] = alpha * acc_sc[...] + jnp.sum(p[..., None] * v, axis=1)
    m_sc[...] = m_new

    @pl.when(j == pl.num_programs(1) - 1)
    def _finalize():
        # weights @ values -> context vectors; one dense [B, E] store.
        o_ref[...] = (acc_sc[...] / l_sc[...]).astype(o_ref.dtype)


def _round_block(b, full):
    """Clamp a block size to the (8, 128) sublane rule: multiple of 8 or full."""
    if b >= full:
        return full
    if full <= 8:
        return full
    return max(8, (b // 8) * 8)


def _choose_blocks(N, T, E, itemsize, tile_budget_bytes):
    """Pick (block_n, block_t) so the values tile is ~tile_budget_bytes."""
    full_seq_bytes = max(T * E * itemsize, 1)
    if 8 * full_seq_bytes <= tile_budget_bytes:
        # Full sequence fits for >= 8 batch rows: keep T whole, grow batch block.
        block_t = T
        block_n = min(N, tile_budget_bytes // full_seq_bytes)
    else:
        # Long sequences: tile T, keep a small (>= 8 sublane) batch block.
        block_n = min(N, 8)
        per_t_bytes = max(block_n * E * itemsize, 1)
        block_t = min(T, tile_budget_bytes // per_t_bytes)

    block_n = _round_block(block_n, N)
    block_t = _round_block(block_t, T)

    # Keep at least 2 batch grid steps when N is large enough, so v7x's second
    # TensorCore gets work via the "parallel" batch axis.
    if N >= 16 and pl.cdiv(N, block_n) < 2:
        block_n = _round_block(N // 2, N)
    return block_n, block_t


def attention(query, values, *, decoder_dim=None, block_n=None, block_t=None):
    """Batched version of Attention.forward.

    query:  [N, decoder_dim]
    values: [N, T, encoder_dim]   (decoder_dim must equal encoder_dim)
    returns [N, encoder_dim]; row i equals the torch module applied to
    (query[i], values[i]).
    """
    N, D = query.shape
    Nv, T, E = values.shape
    assert Nv == N and D == E, "dot-product scoring needs decoder_dim == encoder_dim"
    if decoder_dim is None:
        decoder_dim = D
    scale = 1.0 / math.sqrt(float(decoder_dim))

    v_itemsize = jnp.dtype(values.dtype).itemsize
    q_itemsize = jnp.dtype(query.dtype).itemsize

    # VMEM-aware sizing (v5e/v6e: 128 MiB physical, v7x: 64 MiB per TC).
    try:
        vmem_cap = int(pltpu.get_tpu_info().vmem_capacity_bytes)
    except Exception:  # be conservative if the query is unavailable
        vmem_cap = 64 << 20
    vmem_limit = min(vmem_cap * 3 // 4, 100 << 20)      # ~48 MiB v7x, ~96 MiB v6e
    tile_budget = min(4 << 20, vmem_limit // 8)         # double-buffered + headroom

    auto_n, auto_t = _choose_blocks(N, T, E, v_itemsize, tile_budget)
    if block_n is None:
        block_n = auto_n
    if block_t is None:
        block_t = auto_t
    block_n = _round_block(min(block_n, N), N)
    block_t = _round_block(min(block_t, T), T)

    grid = (pl.cdiv(N, block_n), pl.cdiv(T, block_t))
    mask_t = (T % block_t) != 0

    kernel = functools.partial(
        _attention_kernel, scale=scale, seq_len=T, block_t=block_t, mask_t=mask_t)

    cost = pl.CostEstimate(
        flops=4 * N * T * E,
        transcendentals=N * T,
        bytes_accessed=N * T * E * v_itemsize + N * D * q_itemsize + N * E * v_itemsize,
    )

    return pl.pallas_call(
        kernel,
        out_shape=jax.ShapeDtypeStruct((N, E), values.dtype),
        grid_spec=pltpu.PrefetchScalarGridSpec(
            num_scalar_prefetch=0,
            grid=grid,
            in_specs=[
                pl.BlockSpec((block_n, D), lambda i, j: (i, 0)),
                pl.BlockSpec((block_n, block_t, E), lambda i, j: (i, j, 0)),
            ],
            out_specs=pl.BlockSpec((block_n, E), lambda i, j: (i, 0)),
            scratch_shapes=[
                pltpu.VMEM((block_n, 1), jnp.float32),   # running max
                pltpu.VMEM((block_n, 1), jnp.float32),   # running denom
                pltpu.VMEM((block_n, E), jnp.float32),   # running weighted sum
            ],
        ),
        compiler_params=pltpu.CompilerParams(
            dimension_semantics=("parallel", "arbitrary"),
            vmem_limit_bytes=vmem_limit,
        ),
        cost_estimate=cost,
    )(query, values)


def _reference(query, values, *, decoder_dim):
    # Pure-JAX replica of the torch forward (scaled dot-product _get_weights),
    # applied independently per batch row.
    s = jnp.einsum("ntd,nd->nt", values, query) / math.sqrt(float(decoder_dim))
    w = jax.nn.softmax(s, axis=-1)          # softmax over the sequence axis
    return jnp.einsum("nt,nte->ne", w, values)


if __name__ == "__main__":
    # Small shapes consistent with the module: a batch of 2 independent
    # (query, values) pairs, seq=8, encoder_dim=decoder_dim=32.
    N, T = 2, 8
    encoder_dim = decoder_dim = 32

    root = jax.random.PRNGKey(0)
    kq, kv = jax.random.split(root)
    query = jax.random.normal(kq, (N, decoder_dim), dtype=jnp.float32)
    values = jax.random.normal(kv, (N, T, encoder_dim), dtype=jnp.float32)

    out = attention(query, values, decoder_dim=decoder_dim)
    out = jax.block_until_ready(out)

    ref = _reference(query, values, decoder_dim=decoder_dim)
    assert out.shape == (N, encoder_dim)
    assert jnp.allclose(out, ref, atol=1e-5, rtol=1e-5), "mismatch vs reference"

    print("KERNEL_OK")
</pallas_src>

<mosaic_0001>
module attributes {stable_mosaic.version = 11 : i64} {
  func.func @_attention_kernel(%arg0: i32, %arg1: i32, %arg2: memref<2x32xf32, #tpu.memory_space<vmem>>, %arg3: memref<2x8x32xf32, #tpu.memory_space<vmem>>, %arg4: memref<2x32xf32, #tpu.memory_space<vmem>>, %arg5: memref<2x1xf32, #tpu.memory_space<vmem>>, %arg6: memref<2x1xf32, #tpu.memory_space<vmem>>, %arg7: memref<2x32xf32, #tpu.memory_space<vmem>>) attributes {dimension_semantics = [#tpu.dimension_semantics<parallel>, #tpu.dimension_semantics<arbitrary>], iteration_bounds = array<i64: 1, 1>, scalar_prefetch = 0 : i64, scratch_operands = 3 : i64, tpu.core_type = #tpu.core_type<tc>, window_params = [{transform_indices = @transform_0, window_bounds = array<i64: 2, 32>}, {transform_indices = @transform_1, window_bounds = array<i64: 2, 8, 32>}, {transform_indices = @transform_2, window_bounds = array<i64: 2, 32>}]} {
    %c0_i32 = arith.constant 0 : i32
    %0 = arith.cmpi eq, %arg1, %c0_i32 : i32
    %1 = arith.extui %0 : i1 to i32
    %c0_i32_0 = arith.constant 0 : i32
    %2 = arith.cmpi ne, %1, %c0_i32_0 : i32
    scf.if %2 {
      %cst_23 = arith.constant 0xFF800000 : f32
      %39 = vector.broadcast %cst_23 : f32 to vector<2x1xf32>
      %c0_24 = arith.constant 0 : index
      %c0_25 = arith.constant 0 : index
      %40 = vector.load %arg5[%c0_24, %c0_25] : memref<2x1xf32, #tpu.memory_space<vmem>>, vector<2x1xf32>
      tpu.vector_store %arg5[%c0_24, %c0_25], %39 {strides = array<i32>} : memref<2x1xf32, #tpu.memory_space<vmem>>, vector<2x1xf32>,
      %cst_26 = arith.constant 0.000000e+00 : f32
      %41 = vector.broadcast %cst_26 : f32 to vector<2x1xf32>
      %c0_27 = arith.constant 0 : index
      %c0_28 = arith.constant 0 : index
      %42 = vector.load %arg6[%c0_27, %c0_28] : memref<2x1xf32, #tpu.memory_space<vmem>>, vector<2x1xf32>
      tpu.vector_store %arg6[%c0_27, %c0_28], %41 {strides = array<i32>} : memref<2x1xf32, #tpu.memory_space<vmem>>, vector<2x1xf32>,
      %cst_29 = arith.constant 0.000000e+00 : f32
      %43 = vector.broadcast %cst_29 : f32 to vector<2x32xf32>
      %c0_30 = arith.constant 0 : index
      %c0_31 = arith.constant 0 : index
      %44 = vector.load %arg7[%c0_30, %c0_31] : memref<2x32xf32, #tpu.memory_space<vmem>>, vector<2x32xf32>
      tpu.vector_store %arg7[%c0_30, %c0_31], %43 {strides = array<i32>} : memref<2x32xf32, #tpu.memory_space<vmem>>, vector<2x32xf32>,
    } else {
    }
    %c0 = arith.constant 0 : index
    %c0_1 = arith.constant 0 : index
    %3 = vector.load %arg2[%c0, %c0_1] : memref<2x32xf32, #tpu.memory_space<vmem>>, vector<2x32xf32>
    %cst = arith.constant 0.176776692 : f32
    %4 = vector.broadcast %cst : f32 to vector<2x32xf32>
    %5 = arith.mulf %3, %4 : vector<2x32xf32>
    %c0_2 = arith.constant 0 : index
    %c0_3 = arith.constant 0 : index
    %c0_4 = arith.constant 0 : index
    %6 = vector.load %arg3[%c0_2, %c0_3, %c0_4] : memref<2x8x32xf32, #tpu.memory_space<vmem>>, vector<2x8x32xf32>
    %7 = vector.shape_cast %5 : vector<2x32xf32> to vector<2x1x32xf32>
    %8 = vector.broadcast %7 : vector<2x1x32xf32> to vector<2x8x32xf32>
    %9 = arith.mulf %6, %8 : vector<2x8x32xf32>
    %cst_5 = arith.constant dense<0.000000e+00> : vector<2x8xf32>
    %10 = vector.multi_reduction <add>, %9, %cst_5 [2] : vector<2x8x32xf32> to vector<2x8xf32>
    %c0_6 = arith.constant 0 : index
    %c0_7 = arith.constant 0 : index
    %11 = vector.load %arg5[%c0_6, %c0_7] : memref<2x1xf32, #tpu.memory_space<vmem>>, vector<2x1xf32>
    %cst_8 = arith.constant dense<0xFF800000> : vector<2xf32>
    %12 = vector.multi_reduction <maximumf>, %10, %cst_8 [1] : vector<2x8xf32> to vector<2xf32>
    %13 = vector.shape_cast %12 : vector<2xf32> to vector<2x1xf32>
    %14 = arith.maximumf %11, %13 : vector<2x1xf32>
    %15 = arith.subf %11, %14 : vector<2x1xf32>
    %16 = math.exp %15 : vector<2x1xf32>
    %17 = vector.broadcast %14 : vector<2x1xf32> to vector<2x8xf32>
    %18 = arith.subf %10, %17 : vector<2x8xf32>
    %19 = math.exp %18 : vector<2x8xf32>
    %c0_9 = arith.constant 0 : index
    %c0_10 = arith.constant 0 : index
    %20 = vector.load %arg6[%c0_9, %c0_10] : memref<2x1xf32, #tpu.memory_space<vmem>>, vector<2x1xf32>
    %21 = arith.mulf %16, %20 : vector<2x1xf32>
    %cst_11 = arith.constant dense<0.000000e+00> : vector<2xf32>
    %22 = vector.multi_reduction <add>, %19, %cst_11 [1] : vector<2x8xf32> to vector<2xf32>
    %23 = vector.shape_cast %22 : vector<2xf32> to vector<2x1xf32>
    %24 = arith.addf %21, %23 : vector<2x1xf32>
    %c0_12 = arith.constant 0 : index
    %c0_13 = arith.constant 0 : index
    %25 = vector.load %arg6[%c0_12, %c0_13] : memref<2x1xf32, #tpu.memory_space<vmem>>, vector<2x1xf32>
    tpu.vector_store %arg6[%c0_12, %c0_13], %24 {strides = array<i32>} : memref<2x1xf32, #tpu.memory_space<vmem>>, vector<2x1xf32>,
    %c0_14 = arith.constant 0 : index
    %c0_15 = arith.constant 0 : index
    %26 = vector.load %arg7[%c0_14, %c0_15] : memref<2x32xf32, #tpu.memory_space<vmem>>, vector<2x32xf32>
    %27 = vector.broadcast %16 : vector<2x1xf32> to vector<2x32xf32>
    %28 = arith.mulf %27, %26 : vector<2x32xf32>
    %29 = vector.shape_cast %19 : vector<2x8xf32> to vector<2x8x1xf32>
    %30 = vector.broadcast %29 : vector<2x8x1xf32> to vector<2x8x32xf32>
    %31 = arith.mulf %30, %6 : vector<2x8x32xf32>
    %cst_16 = arith.constant dense<0.000000e+00> : vector<2x32xf32>
    %32 = vector.multi_reduction <add>, %31, %cst_16 [1] : vector<2x8x32xf32> to vector<2x32xf32>
    %33 = arith.addf %28, %32 : vector<2x32xf32>
    %c0_17 = arith.constant 0 : index
    %c0_18 = arith.constant 0 : index
    %34 = vector.load %arg7[%c0_17, %c0_18] : memref<2x32xf32, #tpu.memory_space<vmem>>, vector<2x32xf32>
    tpu.vector_store %arg7[%c0_17, %c0_18], %33 {strides = array<i32>} : memref<2x32xf32, #tpu.memory_space<vmem>>, vector<2x32xf32>,
    %c0_19 = arith.constant 0 : index
    %c0_20 = arith.constant 0 : index
    %35 = vector.load %arg5[%c0_19, %c0_20] : memref<2x1xf32, #tpu.memory_space<vmem>>, vector<2x1xf32>
    tpu.vector_store %arg5[%c0_19, %c0_20], %14 {strides = array<i32>} : memref<2x1xf32, #tpu.memory_space<vmem>>, vector<2x1xf32>,
    %c0_i32_21 = arith.constant 0 : i32
    %36 = arith.cmpi eq, %arg1, %c0_i32_21 : i32
    %37 = arith.extui %36 : i1 to i32
    %c0_i32_22 = arith.constant 0 : i32
    %38 = arith.cmpi ne, %37, %c0_i32_22 : i32
    scf.if %38 {
      %c0_23 = arith.constant 0 : index
      %c0_24 = arith.constant 0 : index
      %39 = vector.load %arg7[%c0_23, %c0_24] : memref<2x32xf32, #tpu.memory_space<vmem>>, vector<2x32xf32>
      %c0_25 = arith.constant 0 : index
      %c0_26 = arith.constant 0 : index
      %40 = vector.load %arg6[%c0_25, %c0_26] : memref<2x1xf32, #tpu.memory_space<vmem>>, vector<2x1xf32>
      %41 = vector.broadcast %40 : vector<2x1xf32> to vector<2x32xf32>
      %42 = arith.divf %39, %41 : vector<2x32xf32>
      %c0_27 = arith.constant 0 : index
      %c0_28 = arith.constant 0 : index
      %43 = vector.load %arg4[%c0_27, %c0_28] : memref<2x32xf32, #tpu.memory_space<vmem>>, vector<2x32xf32>
      tpu.vector_store %arg4[%c0_27, %c0_28], %42 {strides = array<i32>} : memref<2x32xf32, #tpu.memory_space<vmem>>, vector<2x32xf32>,
    } else {
    }
    return
  }
  func.func @transform_0(%arg0: i32, %arg1: i32) -> (i32, i32) {
    %c0_i32 = arith.constant 0 : i32
    %c0_i32_0 = arith.constant 0 : i32
    return %arg0, %c0_i32 : i32, i32
  }
  func.func @transform_1(%arg0: i32, %arg1: i32) -> (i32, i32, i32) {
    %c0_i32 = arith.constant 0 : i32
    %c0_i32_0 = arith.constant 0 : i32
    return %arg0, %arg1, %c0_i32 : i32, i32, i32
  }
  func.func @transform_2(%arg0: i32, %arg1: i32) -> (i32, i32) {
    %c0_i32 = arith.constant 0 : i32
    %c0_i32_0 = arith.constant 0 : i32
    return %arg0, %c0_i32 : i32, i32
  }
}

</mosaic_0001>

<llo_original>
// kernel: tpu_custom_call.1
$region0: #{tpu_custom_call.1}
  #allocation0 [shape = 'u32[]', space=smem, size = 0x4, offset = 0x4, fixed_abs, tag = 'smem constant byte address 0x4 - core index']
  #allocation1 [shape = 'u32[72,128]{1,0:T(1,128)}', space=vmem, size = 0x9000, scoped, tag = 'internal scratch']
  #allocation2 [shape = 'f32[2,1]{1,0:T(2,128)}', space=vmem, size = 0x400, scoped, tag = 'scratch operand']
  #allocation3 [shape = 'f32[2,1]{1,0:T(2,128)}', space=vmem, size = 0x400, scoped, tag = 'scratch operand']
  #allocation4 [shape = 'f32[2,32]{1,0:T(2,128)}', space=vmem, size = 0x400, scoped, tag = 'scratch operand']
  %s0 = inlined_call_operand.hbm [shape: f32[2,32], index: 0, kind: input, shape index: {}]
  %s1 = inlined_call_operand.hbm [shape: f32[2,8,32], index: 1, kind: input, shape index: {}]
  %s2 = inlined_call_operand.hbm [shape: f32[2,32], index: 2, kind: output, shape index: {}]
  %s3 = sld [smem:[#allocation0]]
  $region34: #{tpu_custom_call.1} parent=0
    _
  %s5 = ssub.s32 1, %s3
  %s6 = scalar_select 0, %s5, %s3
  $region1: #{tpu_custom_call.1} parent=0
    #allocation5 [shape = 'u8[1024]{0}', space=vmem, size = 0x400, scoped, tag = 'input window, operand 0, single buffered']
    #allocation6 [shape = 's32[1]{0}', space=sflag, size = 0x4, scoped, tag = 'scoped memory for tpu_custom_call.1']
    #allocation7 [shape = 's32[1]{0}', space=sflag, size = 0x4, scoped, tag = 'scoped memory for tpu_custom_call.1']
    #allocation8 [shape = 'u8[8192]{0}', space=vmem, size = 0x2000, scoped, tag = 'input window, operand 1, single buffered']
    #allocation9 [shape = 's32[1]{0}', space=sflag, size = 0x4, scoped, tag = 'scoped memory for tpu_custom_call.1']
    #allocation10 [shape = 'u8[1024]{0}', space=vmem, size = 0x400, scoped, tag = 'output window, operand 0, single buffered']
    %7 = vsyncpa [#allocation6], 0
    %8 = vsyncpa [#allocation9], 0
    %9 = vsyncpa [#allocation7], 0
    // Predicated region
    $region2: #{tpu_custom_call.1} parent=1 // pred_check
      _
    $region3: #{tpu_custom_call.1} parent=1 // pred_check_branch
      %11 = sbr.rel (0) target = $region5
    $region4: #{tpu_custom_call.1} parent=1 // pred_region
      %13 = vsyncadd [#allocation6], 0
      %s15 = sshll.u32 %s0, 4
      %s16 = int_to_ptr.hbm [resolvable:$true] %s15
      %s17 = sshll.u32 [#allocation5], 4
      %s18 = int_to_ptr.vmem [resolvable:$true] %s17
      %20 = dma.hbm_to_vmem [thread:$0]  %s16, 32, %s18, [#allocation6]
    $region5: #{tpu_custom_call.1} parent=1 // pred_fallthru
      _
    // Predicated region
    $region6: #{tpu_custom_call.1} parent=1 // pred_check
      _
    $region7: #{tpu_custom_call.1} parent=1 // pred_check_branch
      %22 = sbr.rel (0) target = $region9
    $region8: #{tpu_custom_call.1} parent=1 // pred_region
      %24 = vsyncadd [#allocation9], 0
      %s25 = sshll.u32 %s1, 4
      %s26 = int_to_ptr.hbm [resolvable:$true] %s25
      %s27 = sshll.u32 [#allocation8], 4
      %s28 = int_to_ptr.vmem [resolvable:$true] %s27
      %33 = dma.hbm_to_vmem [thread:$0]  %s26, 256, %s28, [#allocation9], 128, 128, 8
    $region9: #{tpu_custom_call.1} parent=1 // pred_fallthru
      _
    // Predicated region
    $region10: #{tpu_custom_call.1} parent=1 // pred_check
      _
    $region11: #{tpu_custom_call.1} parent=1 // pred_check_branch
      %35 = sbr.rel (0) target = $region13
    $region12: #{tpu_custom_call.1} parent=1 // pred_region
      %37 = dma.done [#allocation6], 32
    $region13: #{tpu_custom_call.1} parent=1 // pred_fallthru
      _
    // Predicated region
    $region14: #{tpu_custom_call.1} parent=1 // pred_check
      _
    $region15: #{tpu_custom_call.1} parent=1 // pred_check_branch
      %39 = sbr.rel (0) target = $region17
    $region16: #{tpu_custom_call.1} parent=1 // pred_region
      %41 = dma.done [#allocation9], 256
    $region17: #{tpu_custom_call.1} parent=1 // pred_fallthru
      _
    %p42 = scmp.eq.s32.totalorder 0, 0
    // Predicated region
    $region18: #{tpu_custom_call.1} parent=1 // pred_check
      %p43 = pneg %p42
    $region19: #{tpu_custom_call.1} parent=1 // pred_check_branch
      %45 = sbr.rel (%p43) target = $region21
    $region20: #{tpu_custom_call.1} parent=1 // pred_region
      %vm46 = vcmask 1024
      %47 = vst.msk [vmem:[#allocation2] sm:$0x3] %vm46, -inf
      %48 = vst.msk [vmem:[#allocation3] sm:$0x3] %vm46, 0.0
      %vm49 = vcmask 254976
      %50 = vst.msk [vmem:[#allocation4] sm:$0x3] %vm49, 0.0
    $region21: #{tpu_custom_call.1} parent=1 // pred_fallthru
      _
    %v51 = vld [vmem:[#allocation5] sm:$0x3]
    %v52 = vmul.f32 %v51, 0.17677669
    %v53 = vld [vmem:[#allocation8] sm:$0xff]
    %v54 = vld [vmem:[#allocation8 + $0x8] sm:$0xff]
    %v56 = vrot.slane %v52, 1
    %v57 = vperm.slane %v52, 0
    %v58 = vperm.slane %v56, 0
    %v61 = vmul.f32 %v53, %v57
    %v62 = vmul.f32 %v54, %v58
    %vm63 = vcmask 261120
    %v64 = vsel %vm63, %v61, 0.0
    %65 = vadd.xlane.f32.xlu0 %v64
    %v66 = vpop.xlane.xlu0 %65
    %v67 = vsel %vm63, %v62, 0.0
    %68 = vadd.xlane.f32.xlu0 %v67
    %v69 = vpop.xlane.xlu0 %68
    %v70 = vld [vmem:[#allocation2] sm:$0x3]
    %v73 = vlaneseq
    %v74 = vand.u32 %v73, 127
    %v75 = vperm.slane %v66, %v74
    %v76 = vperm.slane %v69, %v74
    %vm77 = vcmask 1041409
    %v78 = vsel %vm77, %v76, %v75
    %vm80 = vcmask 58368
    %v81 = vsel %vm80, %v78, -inf
    %82 = vmax.xlane.f32.xlu0 %v81
    %v83 = vpop.xlane.xlu0 %82
    %v84 = vmax.f32 %v70, %v83
    %v85 = vsub.f32 %v70, %v84
    %v86 = vmul.f32 %v85, 1.442695
    %v87 = vpow.pop %v86
    %89 = vset.pattern.permute.xlu0 0
    %90 = vperm.xlu0 %89, %v84
    %v91 = vpop.permute.xlu0 %90
    %v92 = vperm.slane %v91, 0
    %v93 = vperm.slane %v91, 1
    %v96 = vsub.f32 %v66, %v92
    %v97 = vsub.f32 %v69, %v93
    %v98 = vmul.f32 %v96, 1.442695
    %v99 = vpow.pop %v98
    %v100 = vmul.f32 %v97, 1.442695
    %v101 = vpow.pop %v100
    %v102 = vld [vmem:[#allocation3] sm:$0x3]
    %v103 = vmul.f32 %v87, %v102
    %106 = vset.pattern.permute.xlu0 0
    %107 = vperm.xlu0 %106, %v99
    %v108 = vpop.permute.xlu0 %107
    %109 = vset.pattern.permute.xlu0 0
    %110 = vperm.xlu0 %109, %v101
    %v111 = vpop.permute.xlu0 %110
    %v112 = vperm.slane %v108, %v74
    %v113 = vperm.slane %v111, %v74
    %v114 = vsel %vm77, %v113, %v112
    %v116 = vsel %vm80, %v114, 0.0
    %117 = vadd.xlane.f32.xlu0 %v116
    %v118 = vpop.xlane.xlu0 %117
    %v119 = vadd.f32 %v103, %v118
    %vm120 = vcmask 1024
    %121 = vst.msk [vmem:[#allocation3] sm:$0x3] %vm120, %v119
    %v122 = vld [vmem:[#allocation4] sm:$0x3]
    %124 = vset.pattern.permute.xlu0 0
    %125 = vperm.xlu0 %124, %v87
    %v126 = vpop.permute.xlu0 %125
    %v128 = vmul.f32 %v126, %v122
    %v131 = vmul.f32 %v108, %v53
    %v132 = vmul.f32 %v111, %v54
    %v133 = vsel %vm63, %v131, 0.0
    %v134 = vrot.slane %v133, 4
    %v135 = vadd.f32 %v133, %v134
    %v136 = vrot.slane %v135, 2
    %v137 = vadd.f32 %v135, %v136
    %v138 = vrot.slane %v137, 1
    %v139 = vadd.f32 %v137, %v138
    %v140 = vsel %vm63, %v132, 0.0
    %v141 = vrot.slane %v140, 4
    %v142 = vadd.f32 %v140, %v141
    %v143 = vrot.slane %v142, 2
    %v144 = vadd.f32 %v142, %v143
    %v145 = vrot.slane %v144, 1
    %v146 = vadd.f32 %v144, %v145
    %v149 = vsel %vm77, %v146, %v139
    %v151 = vadd.f32 %v128, %v149
    %vm152 = vcmask 254976
    %153 = vst.msk [vmem:[#allocation4] sm:$0x3] %vm152, %v151
    %154 = vst.msk [vmem:[#allocation2] sm:$0x3] %vm120, %v84
    // Predicated region
    $region22: #{tpu_custom_call.1} parent=1 // pred_check
      %p155 = pneg %p42
    $region23: #{tpu_custom_call.1} parent=1 // pred_check_branch
      %157 = sbr.rel (%p155) target = $region25
    $region24: #{tpu_custom_call.1} parent=1 // pred_region
      %v158 = vld [vmem:[#allocation4] sm:$0x3]
      %v159 = vld [vmem:[#allocation3] sm:$0x3]
      %161 = vset.pattern.permute.xlu0 0
      %162 = vperm.xlu0 %161, %v159
      %v163 = vpop.permute.xlu0 %162
      %v165 = vrcp.pop %v163
      %v166 = vmul.f32 %v163, %v165
      %v167 = vsub.f32 1.0, %v166
      %v168 = vmul.f32 %v165, %v167
      %v169 = vadd.f32 %v165, %v168
      %vm170 = vweird.f32 %v163
      %vm171 = vweird.f32 %v165
      %vm172 = vmor %vm170, %vm171
      %v173 = vsel %vm172, %v165, %v169
      %v174 = vand.u32 2147483647, %v163
      %vm175 = vcmp.eq.f32.partialorder %v174, 8.507059e+37
      %v176 = vand.u32 %v163, 2147483648
      %v177 = vor.u32 1.1754944e-38, %v176
      %v178 = vsel %vm175, %v177, %v173
      %v179 = vmul.f32 %v158, %v178
      %180 = vst.msk [vmem:[#allocation10] sm:$0x3] %vm152, %v179
    $region25: #{tpu_custom_call.1} parent=1 // pred_fallthru
      _
    // Predicated region
    $region26: #{tpu_custom_call.1} parent=1 // pred_check
      _
    $region27: #{tpu_custom_call.1} parent=1 // pred_check_branch
      %182 = sbr.rel (0) target = $region29
    $region28: #{tpu_custom_call.1} parent=1 // pred_region
      %184 = vsyncadd [#allocation7], 0
      %s186 = sshll.u32 [#allocation10], 4
      %s187 = int_to_ptr.vmem [resolvable:$true] %s186
      %s188 = sshll.u32 %s2, 4
      %s189 = int_to_ptr.hbm [resolvable:$true] %s188
      %191 = dma.vmem_to_hbm [thread:$0]  %s187, 32, %s189, [#allocation7]
    $region29: #{tpu_custom_call.1} parent=1 // pred_fallthru
      _
    // Predicated region
    $region30: #{tpu_custom_call.1} parent=1 // pred_check
      _
    $region31: #{tpu_custom_call.1} parent=1 // pred_check_branch
      %193 = sbr.rel (0) target = $region33
    $region32: #{tpu_custom_call.1} parent=1 // pred_region
      %195 = dma.done [#allocation7], 32
    $region33: #{tpu_custom_call.1} parent=1 // pred_fallthru
      _
    %196 = vsyncpa [#allocation6], 1
    %197 = vsyncpa [#allocation9], 1
    %198 = vsyncpa [#allocation7], 1

</llo_original>
